<compile_context>
chip_gen: v7x
topology: tpu7x:2x2x1
jax: 0.10.0
libtpu: 0.0.40
codegen_flags: <defaults>
</compile_context>

<pallas_src>
import jax
import jax.numpy as jnp
from jax.experimental import pallas as pl
from jax.experimental.pallas import tpu as pltpu


# ---------------------------------------------------------------------------
# Config (mirrors CFG.* fields used by the PyTorch module)
# ---------------------------------------------------------------------------
class CFG:
    obs_embed_dim = 16
    action_embed_dim = 8
    latent_dim = 8
    decoder_hidden = [32, 16]          # mlp sizes = [input_dim, 32, 16]
    # decoder_activation = ReLU (applied to every mlp layer except the last)


OBS_SIZE = 16
ACTION_SIZE = 8
BATCH = 8

# Derived dims.
D_ACT = OBS_SIZE + ACTION_SIZE + OBS_SIZE + CFG.latent_dim                # 48
D_EMB = CFG.obs_embed_dim * 2 + CFG.action_embed_dim + CFG.latent_dim     # 48
assert D_ACT == D_EMB, "packed-slab layout assumes input width == cat width"
D = D_ACT                                                                 # 48
N_RELU = CFG.obs_embed_dim * 2 + CFG.action_embed_dim                     # 40
H1, H2 = CFG.decoder_hidden                                               # 32, 16

# Activation tile layout: [s(16) | a(8) | s_next(16) | latent(8) | eps | pad].
D_IN = 64                                                                 # act lanes
EPS_COL = 48

# bf16 weight slab (row offsets are multiples of 16 = bf16 sublane packing).
_R_WF = 0                 # fused feature extractors + identity latent (64, 48)
_R_W1 = _R_WF + D_IN      # mlp layer 1, (48, 48), real [:, :32]
_R_WH = _R_W1 + D         # fused (mlp layer 2 @ [mu|logvar] head), (48, 48)
W_SLAB_ROWS = _R_WH + D   # 160

# f32 vector slab (biases + ReLU mask), each row 8-sublane aligned.
_V_BF, _V_B1, _V_BH, _V_MASK = 0, 8, 16, 24
V_SLAB_ROWS = 32


# ---------------------------------------------------------------------------
# Pallas kernel: full reward_network forward (3 matmuls)
# ---------------------------------------------------------------------------
def _reward_kernel(act_ref, w_ref, v_ref, out_ref):
    f32 = jnp.float32
    bf16 = jnp.bfloat16

    act = act_ref[...]                               # (tb, 64) bf16

    wf = w_ref[_R_WF:_R_WF + D_IN, :]                # (64, 48) bf16, block-diag
    w1 = w_ref[_R_W1:_R_W1 + D, :]                   # (48, 48) bf16
    wh = w_ref[_R_WH:_R_WH + D, :]                   # (48, 48) bf16 (w2 @ head folded)

    b_f = v_ref[_V_BF:_V_BF + 1, :]                  # (1, 48) f32
    b_1 = v_ref[_V_B1:_V_B1 + 1, :]
    b_h = v_ref[_V_BH:_V_BH + 1, :]
    relu_mask = v_ref[_V_MASK:_V_MASK + 1, :]        # 1.0 on embed cols, 0.0 on latent

    # Fused feature extractors: one block-diagonal matmul produces
    # [s_emb | a_emb | sn_emb | latent]; ReLU only where mask == 1
    # (latent block is identity with zero bias -> passes through).
    pre = jnp.dot(act, wf, preferred_element_type=f32) + b_f
    x = pre - relu_mask * jnp.minimum(pre, 0.0)

    # mlp layer 1 (ReLU).
    h = jnp.dot(x.astype(bf16), w1, preferred_element_type=f32) + b_1
    h = jnp.maximum(h, 0.0)

    # mlp layer 2 + mu/logvar heads, algebraically folded into one matmul.
    head = jnp.dot(h.astype(bf16), wh, preferred_element_type=f32) + b_h

    mu = head[:, 0:1]
    logvar = head[:, 1:2]
    std = jnp.exp(0.5 * logvar)
    eps = act[:, EPS_COL:EPS_COL + 1].astype(f32)
    sample = eps * std + mu                          # eps.mul(std).add_(mu)

    # Single packed store: [mu, logvar, sample, std].
    out_ref[...] = jnp.concatenate([mu, logvar, sample, std], axis=1)


# ---------------------------------------------------------------------------
# Tiling choice
# ---------------------------------------------------------------------------
def _round_up(n, m):
    return ((n + m - 1) // m) * m


def _choose_tile(B):
    tb = min(_round_up(B, 8), 1024)
    # v7x has 2 TensorCores: for large B keep >= 2 grid steps so the
    # "parallel" batch axis actually shards; negligible cost on 1-TC chips.
    if B >= 512 and pl.cdiv(B, tb) < 2:
        tb = _round_up(pl.cdiv(B, 2), 8)
    return tb


# ---------------------------------------------------------------------------
# Wrapper
# ---------------------------------------------------------------------------
@jax.jit
def reward_network_forward(s, a, s_next, latent, eps, w_slab, v_slab):
    B = s.shape[0]
    # Host-side concat of raw inputs + eps + zero pad -> one activation DMA.
    pad = jnp.zeros((B, D_IN - D - 1), jnp.float32)
    act = jnp.concatenate([s, a, s_next, latent, eps, pad],
                          axis=1).astype(jnp.bfloat16)          # (B, 64)

    tb = _choose_tile(B)
    grid = (pl.cdiv(B, tb),)

    out = pl.pallas_call(
        _reward_kernel,
        out_shape=jax.ShapeDtypeStruct((B, 4), jnp.float32),
        grid_spec=pltpu.PrefetchScalarGridSpec(
            num_scalar_prefetch=0,
            grid=grid,
            in_specs=[
                pl.BlockSpec((tb, D_IN), lambda i: (i, 0)),          # activations+eps
                pl.BlockSpec((W_SLAB_ROWS, D), lambda i: (0, 0)),    # bf16 weight slab
                pl.BlockSpec((V_SLAB_ROWS, D), lambda i: (0, 0)),    # f32 bias/mask slab
            ],
            out_specs=pl.BlockSpec((tb, 4), lambda i: (i, 0)),
        ),
        compiler_params=pltpu.CompilerParams(
            dimension_semantics=("parallel",)),
    )(act, w_slab, v_slab)

    return out[:, 0:1], out[:, 1:2], out[:, 2:3], out[:, 3:4]


# ---------------------------------------------------------------------------
# Deterministic parameter construction (synthetic, no checkpoint)
# ---------------------------------------------------------------------------
def make_params(key):
    def linear_params(key, d_in, d_out):
        k_w, k_b = jax.random.split(key)
        bound = 1.0 / jnp.sqrt(d_in)
        # stored as (in, out) so the math is x @ W + b
        w = jax.random.uniform(k_w, (d_in, d_out), jnp.float32, -bound, bound)
        b = jax.random.uniform(k_b, (1, d_out), jnp.float32, -bound, bound)
        return w, b

    keys = jax.random.split(key, 7)
    input_dim = CFG.obs_embed_dim * 2 + CFG.action_embed_dim + CFG.latent_dim

    ws, bs = linear_params(keys[0], OBS_SIZE, CFG.obs_embed_dim)        # fc_s
    wa, ba = linear_params(keys[1], ACTION_SIZE, CFG.action_embed_dim)  # fc_a
    wsn, bsn = linear_params(keys[2], OBS_SIZE, CFG.obs_embed_dim)      # fc_s_next
    w1, b1 = linear_params(keys[3], input_dim, H1)                      # mlp[0]
    w2, b2 = linear_params(keys[4], H1, H2)                             # mlp[1]
    wmu, bmu = linear_params(keys[5], H2, 1)                            # fc_mu
    wlv, blv = linear_params(keys[6], H2, 1)                            # fc_logvar

    return (ws, bs, wa, ba, wsn, bsn, w1, b1, w2, b2, wmu, bmu, wlv, blv)


def pack_params(params):
    """Pack into a bf16 weight slab (160,48) + f32 bias/mask slab (32,48)."""
    (ws, bs, wa, ba, wsn, bsn, w1, b1, w2, b2, wmu, bmu, wlv, blv) = params
    f32 = jnp.float32
    oe, ae, ld = CFG.obs_embed_dim, CFG.action_embed_dim, CFG.latent_dim

    # Output-column offsets of the cat layout: [s_emb, a_emb, sn_emb, latent].
    c0, c1, c2, c3 = 0, oe, oe + ae, oe + ae + oe
    # Input-row offsets of the raw-input layout: [s, a, s_next, latent].
    r0 = 0
    r1 = OBS_SIZE
    r2 = OBS_SIZE + ACTION_SIZE
    r3 = OBS_SIZE + ACTION_SIZE + OBS_SIZE

    # Fused feature-extractor weight (rows 48..63 are zero: eps + pad columns).
    wf = jnp.zeros((D_IN, D), f32)
    wf = wf.at[r0:r0 + OBS_SIZE, c0:c0 + oe].set(ws)
    wf = wf.at[r1:r1 + ACTION_SIZE, c1:c1 + ae].set(wa)
    wf = wf.at[r2:r2 + OBS_SIZE, c2:c2 + oe].set(wsn)
    wf = wf.at[r3:r3 + ld, c3:c3 + ld].set(jnp.eye(ld, dtype=f32))  # latent pass-through

    w1p = jnp.zeros((D, D), f32).at[:, :H1].set(w1)

    # Algebraic fold: (mlp layer 2) @ [Wmu | Wlv]  -> one head matmul.
    wh_head = jnp.concatenate([wmu, wlv], axis=1)                   # (16, 2)
    wh_fused = w2 @ wh_head                                         # (32, 2)
    whp = jnp.zeros((D, D), f32).at[:H1, :2].set(wh_fused)

    w_slab = jnp.concatenate([wf, w1p, whp], axis=0).astype(jnp.bfloat16)
    assert w_slab.shape == (W_SLAB_ROWS, D)

    bf = jnp.zeros((1, D), f32)
    bf = bf.at[:, c0:c0 + oe].set(bs).at[:, c1:c1 + ae].set(ba).at[:, c2:c2 + oe].set(bsn)
    b1p = jnp.zeros((1, D), f32).at[:, :H1].set(b1)
    bh_fused = b2 @ wh_head + jnp.concatenate([bmu, blv], axis=1)   # (1, 2)
    bhp = jnp.zeros((1, D), f32).at[:, :2].set(bh_fused)
    relu_mask = jnp.zeros((1, D), f32).at[:, :N_RELU].set(1.0)

    v_slab = jnp.zeros((V_SLAB_ROWS, D), f32)
    v_slab = v_slab.at[_V_BF:_V_BF + 1].set(bf)
    v_slab = v_slab.at[_V_B1:_V_B1 + 1].set(b1p)
    v_slab = v_slab.at[_V_BH:_V_BH + 1].set(bhp)
    v_slab = v_slab.at[_V_MASK:_V_MASK + 1].set(relu_mask)
    return w_slab, v_slab


# ---------------------------------------------------------------------------
# Pure-JAX f32 reference (for correctness check)
# ---------------------------------------------------------------------------
def reference_forward(s, a, s_next, latent, eps, params):
    (ws, bs, wa, ba, wsn, bsn, w1, b1, w2, b2, wmu, bmu, wlv, blv) = params
    s_e = jax.nn.relu(s @ ws + bs)
    a_e = jax.nn.relu(a @ wa + ba)
    sn_e = jax.nn.relu(s_next @ wsn + bsn)
    x = jnp.concatenate([s_e, a_e, sn_e, latent], axis=1)
    h = jax.nn.relu(x @ w1 + b1)
    h = h @ w2 + b2
    mu = h @ wmu + bmu
    logvar = h @ wlv + blv
    std = jnp.exp(0.5 * logvar)
    return mu, logvar, eps * std + mu, std


# ---------------------------------------------------------------------------
if __name__ == "__main__":
    key = jax.random.PRNGKey(0)
    k_s, k_a, k_sn, k_z, k_eps, k_p = jax.random.split(key, 6)

    s = jax.random.normal(k_s, (BATCH, OBS_SIZE), jnp.float32)
    a = jax.random.normal(k_a, (BATCH, ACTION_SIZE), jnp.float32)
    s_next = jax.random.normal(k_sn, (BATCH, OBS_SIZE), jnp.float32)
    latent = jax.random.normal(k_z, (BATCH, CFG.latent_dim), jnp.float32)
    # torch.randn_like(std) -> deterministic N(0,1) noise generated host-side
    eps = jax.random.normal(k_eps, (BATCH, 1), jnp.float32)

    params = make_params(k_p)
    w_slab, v_slab = pack_params(params)

    outs = reward_network_forward(s, a, s_next, latent, eps, w_slab, v_slab)
    outs = jax.block_until_ready(outs)

    # bf16 matmul operands -> tolerance loosened vs the f32 reference.
    refs = reference_forward(s, a, s_next, latent, eps, params)
    for o, r in zip(outs, refs):
        assert o.shape == (BATCH, 1)
        assert jnp.allclose(o, r, atol=5e-2, rtol=5e-2), "mismatch vs f32 reference"

    print("KERNEL_OK")
</pallas_src>

<mosaic_0001>
module attributes {stable_mosaic.version = 11 : i64} {
  func.func @_reward_kernel(%arg0: i32, %arg1: memref<8x64xbf16, #tpu.memory_space<vmem>>, %arg2: memref<160x48xbf16, #tpu.memory_space<vmem>>, %arg3: memref<32x48xf32, #tpu.memory_space<vmem>>, %arg4: memref<8x4xf32, #tpu.memory_space<vmem>>) attributes {dimension_semantics = [#tpu.dimension_semantics<parallel>], iteration_bounds = array<i64: 1>, scalar_prefetch = 0 : i64, scratch_operands = 0 : i64, tpu.core_type = #tpu.core_type<tc>, window_params = [{transform_indices = @transform_0, window_bounds = array<i64: 8, 64>}, {pipeline_mode = #tpu.pipeline_mode<synchronous>, transform_indices = @transform_1, window_bounds = array<i64: 160, 48>}, {pipeline_mode = #tpu.pipeline_mode<synchronous>, transform_indices = @transform_2, window_bounds = array<i64: 32, 48>}, {transform_indices = @transform_3, window_bounds = array<i64: 8, 4>}]} {
    %c0 = arith.constant 0 : index
    %c0_0 = arith.constant 0 : index
    %0 = vector.load %arg1[%c0, %c0_0] : memref<8x64xbf16, #tpu.memory_space<vmem>>, vector<8x64xbf16>
    %c0_1 = arith.constant 0 : index
    %c0_2 = arith.constant 0 : index
    %1 = vector.load %arg2[%c0_1, %c0_2] : memref<160x48xbf16, #tpu.memory_space<vmem>>, vector<64x48xbf16>
    %c64 = arith.constant 64 : index
    %c0_3 = arith.constant 0 : index
    %2 = vector.load %arg2[%c64, %c0_3] : memref<160x48xbf16, #tpu.memory_space<vmem>>, vector<48x48xbf16>
    %c112 = arith.constant 112 : index
    %c0_4 = arith.constant 0 : index
    %3 = vector.load %arg2[%c112, %c0_4] : memref<160x48xbf16, #tpu.memory_space<vmem>>, vector<48x48xbf16>
    %c0_5 = arith.constant 0 : index
    %c0_6 = arith.constant 0 : index
    %4 = vector.load %arg3[%c0_5, %c0_6] : memref<32x48xf32, #tpu.memory_space<vmem>>, vector<1x48xf32>
    %c8 = arith.constant 8 : index
    %c0_7 = arith.constant 0 : index
    %5 = vector.load %arg3[%c8, %c0_7] : memref<32x48xf32, #tpu.memory_space<vmem>>, vector<1x48xf32>
    %c16 = arith.constant 16 : index
    %c0_8 = arith.constant 0 : index
    %6 = vector.load %arg3[%c16, %c0_8] : memref<32x48xf32, #tpu.memory_space<vmem>>, vector<1x48xf32>
    %c24 = arith.constant 24 : index
    %c0_9 = arith.constant 0 : index
    %7 = vector.load %arg3[%c24, %c0_9] : memref<32x48xf32, #tpu.memory_space<vmem>>, vector<1x48xf32>
    %cst = arith.constant dense<0.000000e+00> : vector<8x48xf32>
    %8 = tpu.matmul %0, %1, %cst {dimension_numbers = #tpu.dot_dimension_numbers<[1], [0], [0], [1], [0, 0, 1, 1], [], []>} : vector<8x64xbf16>, vector<64x48xbf16>, vector<8x48xf32> -> vector<8x48xf32>
    %9 = vector.broadcast %4 : vector<1x48xf32> to vector<8x48xf32>
    %10 = arith.addf %8, %9 : vector<8x48xf32>
    %cst_10 = arith.constant 0.000000e+00 : f32
    %11 = vector.broadcast %cst_10 : f32 to vector<8x48xf32>
    %12 = arith.minimumf %10, %11 : vector<8x48xf32>
    %13 = vector.broadcast %7 : vector<1x48xf32> to vector<8x48xf32>
    %14 = arith.mulf %13, %12 : vector<8x48xf32>
    %15 = arith.subf %10, %14 : vector<8x48xf32>
    %16 = arith.truncf %15 : vector<8x48xf32> to vector<8x48xbf16>
    %cst_11 = arith.constant dense<0.000000e+00> : vector<8x48xf32>
    %17 = tpu.matmul %16, %2, %cst_11 {dimension_numbers = #tpu.dot_dimension_numbers<[1], [0], [0], [1], [0, 0, 1, 1], [], []>} : vector<8x48xbf16>, vector<48x48xbf16>, vector<8x48xf32> -> vector<8x48xf32>
    %18 = vector.broadcast %5 : vector<1x48xf32> to vector<8x48xf32>
    %19 = arith.addf %17, %18 : vector<8x48xf32>
    %cst_12 = arith.constant 0.000000e+00 : f32
    %20 = vector.broadcast %cst_12 : f32 to vector<8x48xf32>
    %21 = arith.maximumf %19, %20 : vector<8x48xf32>
    %22 = arith.truncf %21 : vector<8x48xf32> to vector<8x48xbf16>
    %cst_13 = arith.constant dense<0.000000e+00> : vector<8x48xf32>
    %23 = tpu.matmul %22, %3, %cst_13 {dimension_numbers = #tpu.dot_dimension_numbers<[1], [0], [0], [1], [0, 0, 1, 1], [], []>} : vector<8x48xbf16>, vector<48x48xbf16>, vector<8x48xf32> -> vector<8x48xf32>
    %24 = vector.broadcast %6 : vector<1x48xf32> to vector<8x48xf32>
    %25 = arith.addf %23, %24 : vector<8x48xf32>
    %26 = vector.extract_strided_slice %25 {offsets = [0, 0], sizes = [8, 1], strides = [1, 1]} : vector<8x48xf32> to vector<8x1xf32>
    %27 = vector.extract_strided_slice %25 {offsets = [0, 1], sizes = [8, 1], strides = [1, 1]} : vector<8x48xf32> to vector<8x1xf32>
    %cst_14 = arith.constant 5.000000e-01 : f32
    %28 = vector.broadcast %cst_14 : f32 to vector<8x1xf32>
    %29 = arith.mulf %28, %27 : vector<8x1xf32>
    %30 = math.exp %29 : vector<8x1xf32>
    %31 = vector.extract_strided_slice %0 {offsets = [0, 48], sizes = [8, 1], strides = [1, 1]} : vector<8x64xbf16> to vector<8x1xbf16>
    %32 = arith.extf %31 : vector<8x1xbf16> to vector<8x1xf32>
    %33 = arith.mulf %32, %30 : vector<8x1xf32>
    %34 = arith.addf %33, %26 : vector<8x1xf32>
    %35 = tpu.concatenate %26, %27, %34, %30 in 1 : vector<8x1xf32>, vector<8x1xf32>, vector<8x1xf32>, vector<8x1xf32> -> vector<8x4xf32>
    %c0_15 = arith.constant 0 : index
    %c0_16 = arith.constant 0 : index
    %36 = vector.load %arg4[%c0_15, %c0_16] : memref<8x4xf32, #tpu.memory_space<vmem>>, vector<8x4xf32>
    tpu.vector_store %arg4[%c0_15, %c0_16], %35 {strides = array<i32>} : memref<8x4xf32, #tpu.memory_space<vmem>>, vector<8x4xf32>,
    return
  }
  func.func @transform_0(%arg0: i32) -> (i32, i32) {
    %c0_i32 = arith.constant 0 : i32
    %c0_i32_0 = arith.constant 0 : i32
    return %arg0, %c0_i32 : i32, i32
  }
  func.func @transform_1(%arg0: i32) -> (i32, i32) {
    %c0_i32 = arith.constant 0 : i32
    %c0_i32_0 = arith.constant 0 : i32
    %c0_i32_1 = arith.constant 0 : i32
    return %c0_i32, %c0_i32_0 : i32, i32
  }
  func.func @transform_2(%arg0: i32) -> (i32, i32) {
    %c0_i32 = arith.constant 0 : i32
    %c0_i32_0 = arith.constant 0 : i32
    %c0_i32_1 = arith.constant 0 : i32
    return %c0_i32, %c0_i32_0 : i32, i32
  }
  func.func @transform_3(%arg0: i32) -> (i32, i32) {
    %c0_i32 = arith.constant 0 : i32
    %c0_i32_0 = arith.constant 0 : i32
    return %arg0, %c0_i32 : i32, i32
  }
}

</mosaic_0001>

<llo_original>
// kernel: reward_network_forward.1
$region0: #{reward_network_forward.1}
  #allocation0 [shape = 'u32[]', space=smem, size = 0x4, offset = 0x4, fixed_abs, tag = 'smem constant byte address 0x4 - core index']
  #allocation1 [shape = 'u32[144,128]{1,0:T(1,128)}', space=vmem, size = 0x12000, scoped, tag = 'internal scratch']
  %s0 = inlined_call_operand.vmem [shape: bf16[8,64], index: 0, kind: input, shape index: {}]
  %s1 = inlined_call_operand.vmem [shape: bf16[160,48], index: 1, kind: input, shape index: {}]
  %s2 = inlined_call_operand.vmem [shape: f32[32,48], index: 2, kind: input, shape index: {}]
  %s3 = inlined_call_operand.vmem [shape: f32[8,4], index: 3, kind: output, shape index: {}]
  %s4 = sld [smem:[#allocation0]]
  $region22: #{reward_network_forward.1} parent=0
    _
  %s6 = ssub.s32 1, %s4
  %s7 = scalar_select 0, %s6, %s4
  // Predicated region
  $region2: #{reward_network_forward.1} parent=0 // pred_check
    _
  $region3: #{reward_network_forward.1} parent=0 // pred_check_branch
    %9 = sbr.rel (0) target = $region5
  $region4: #{reward_network_forward.1} parent=0 // pred_region
    _
  $region5: #{reward_network_forward.1} parent=0 // pred_fallthru
    _
  // Predicated region
  $region6: #{reward_network_forward.1} parent=0 // pred_check
    _
  $region7: #{reward_network_forward.1} parent=0 // pred_check_branch
    %11 = sbr.rel (0) target = $region9
  $region8: #{reward_network_forward.1} parent=0 // pred_region
    _
  $region9: #{reward_network_forward.1} parent=0 // pred_fallthru
    _
  // Predicated region
  $region10: #{reward_network_forward.1} parent=0 // pred_check
    _
  $region11: #{reward_network_forward.1} parent=0 // pred_check_branch
    %13 = sbr.rel (0) target = $region13
  $region12: #{reward_network_forward.1} parent=0 // pred_region
    _
  $region13: #{reward_network_forward.1} parent=0 // pred_fallthru
    _
  %v15 = vld [vmem:[%s0] sm:$0xf]
  %v16 = vld [vmem:[%s1] sm:$0xf]
  %v17 = vld [vmem:[%s1 + $0x4] sm:$0xf]
  %v18 = vld [vmem:[%s1 + $0x8] sm:$0xf]
  %v19 = vld [vmem:[%s1 + $0xc] sm:$0xf]
  %v20 = vld [vmem:[%s1 + $0x10] sm:$0xf]
  %v21 = vld [vmem:[%s1 + $0x14] sm:$0xf]
  %v22 = vld [vmem:[%s1 + $0x18] sm:$0xf]
  %v23 = vld [vmem:[%s1 + $0x1c] sm:$0xf]
  %v24 = vld [vmem:[%s1 + $0x20] sm:$0xf]
  %v25 = vld [vmem:[%s1 + $0x24] sm:$0xf]
  %v26 = vld [vmem:[%s1 + $0x28] sm:$0xf]
  %v27 = vld [vmem:[%s1 + $0x2c] sm:$0xf]
  %v28 = vld [vmem:[%s1 + $0x30] sm:$0xf]
  %v29 = vld [vmem:[%s1 + $0x34] sm:$0xf]
  %v30 = vld [vmem:[%s1 + $0x38] sm:$0xf]
  %v31 = vld [vmem:[%s1 + $0x3c] sm:$0xf]
  %v32 = vld [vmem:[%s1 + $0x40] sm:$0xf]
  %v33 = vld [vmem:[%s1 + $0x44] sm:$0xf]
  %v34 = vld [vmem:[%s1 + $0x48] sm:$0xf]
  %v35 = vld [vmem:[%s1 + $0x4c] sm:$0xf]
  %v36 = vld [vmem:[%s2] sm:$0x1]
  %v37 = vld [vmem:[%s2 + $0x8] sm:$0x1]
  %v38 = vld [vmem:[%s2 + $0x10] sm:$0x1]
  %v39 = vld [vmem:[%s2 + $0x18] sm:$0x1]
  %v40 = vlaneseq
  %v41 = vshrl.u32 %v40, 7
  %v42 = vsub.s32 0, %v41
  %v43 = vrot.slane %v36, %v42
  %v52 = vunpack.c.l.b16 %v16
  %v53 = vunpack.c.l.b16 %v17
  %v54 = vunpack.c.l.b16 %v18
  %v55 = vunpack.c.l.b16 %v19
  %v56 = vunpack.c.l.b16 %v20
  %v57 = vunpack.c.l.b16 %v21
  %v58 = vunpack.c.l.b16 %v22
  %v59 = vunpack.c.l.b16 %v23
  %v60 = vpack.c.b16 %v53, %v52
  %v61 = vpack.c.b16 %v55, %v54
  %v62 = vpack.c.b16 %v57, %v56
  %v63 = vpack.c.b16 %v59, %v58
  %vm68 = vcmask 523264
  %v70 = vsel %vm68, %v15, 0
  %72 = vmatprep.subr.bf16.mxu0 0
  %73 = vmatpush1.bf16.msra.mxu0 %v60
  %74 = vmatprep.subr.bf16.mxu0 0
  %75 = vmatpush1.bf16.msra.mxu0 %v61
  %76 = vmatprep.subr.bf16.mxu0 0
  %77 = vmatpush1.bf16.msra.mxu0 %v62
  %78 = vmatprep.subr.bf16.mxu0 0
  %79 = vmatpush1.bf16.msra.mxu0 %v63
  %80 = vmatprep.subr.bf16.mxu0 0
  %81 = vmatpush1.bf16.msra.mxu0 0
  %82 = vmatprep.subr.bf16.mxu0 0
  %83 = vmatpush1.bf16.msra.mxu0 0
  %84 = vmatprep.subr.bf16.mxu0 0
  %85 = vmatpush1.bf16.msra.mxu0 0
  %86 = vmatprep.subr.bf16.mxu0 0
  %87 = vmatpush1.bf16.msra.mxu0 0
  %88 = vmatprep.subr.bf16.mxu0 0
  %89 = vmatpush1.bf16.msra.mxu0 0
  %90 = vmatprep.subr.bf16.mxu0 0
  %91 = vmatpush1.bf16.msra.mxu0 0
  %92 = vmatprep.subr.bf16.mxu0 0
  %93 = vmatpush1.bf16.msra.mxu0 0
  %94 = vmatprep.subr.bf16.mxu0 0
  %95 = vmatpush1.bf16.msra.mxu0 0
  %96 = vmatprep.subr.bf16.mxu0 0
  %97 = vmatpush1.bf16.msra.mxu0 0
  %98 = vmatprep.subr.bf16.mxu0 0
  %99 = vmatpush1.bf16.msra.mxu0 0
  %100 = vmatprep.subr.bf16.mxu0 0
  %101 = vmatpush1.bf16.msra.mxu0 0
  %102 = vmatprep.subr.bf16.mxu0 0
  %103 = vmatpush1.bf16.msra.mxu0 0
  %104 = vmatprep.mubr.bf16.mxu0 0
  %105 = vmatmul.mubr.bf16.gmra.mrb[0].mxu0 %v70
  %v106 = vpop.f32.mrb[0].mxu0
  %v107 = vadd.f32 %v43, %v106
  %v108 = vpop.f32.mrb[0].mxu0
  %v109 = vpop.f32.mrb[0].mxu0
  %v110 = vpop.f32.mrb[0].mxu0
  %111 = vdwg.mxu0
  %v112 = vmin.f32 %v107, 0.0
  %v113 = vlaneseq
  %v114 = vshrl.u32 %v113, 7
  %v115 = vsub.s32 0, %v114
  %v116 = vrot.slane %v39, %v115
  %v117 = vmul.f32 %v116, %v112
  %v118 = vsub.f32 %v107, %v117
  %v119 = vpack.c.bf16 %v118, %v118
  %v120 = vlaneseq
  %v121 = vshrl.u32 %v120, 7
  %v122 = vsub.s32 0, %v121
  %v123 = vrot.slane %v37, %v122
  %v130 = vunpack.c.l.b16 %v24
  %v131 = vunpack.c.l.b16 %v25
  %v132 = vunpack.c.l.b16 %v26
  %v133 = vunpack.c.l.b16 %v27
  %v134 = vunpack.c.l.b16 %v28
  %v135 = vunpack.c.l.b16 %v29
  %v136 = vpack.c.b16 %v131, %v130
  %v137 = vpack.c.b16 %v133, %v132
  %v138 = vpack.c.b16 %v135, %v134
  %vm142 = vcmask 392192
  %v144 = vsel %vm142, %v119, 0
  %146 = vmatprep.subr.bf16.mxu0 0
  %147 = vmatpush1.bf16.msra.mxu0 %v136
  %148 = vmatprep.subr.bf16.mxu0 0
  %149 = vmatpush1.bf16.msra.mxu0 %v137
  %150 = vmatprep.subr.bf16.mxu0 0
  %151 = vmatpush1.bf16.msra.mxu0 %v138
  %152 = vmatprep.subr.bf16.mxu0 0
  %153 = vmatpush1.bf16.msra.mxu0 0
  %154 = vmatprep.subr.bf16.mxu0 0
  %155 = vmatpush1.bf16.msra.mxu0 0
  %156 = vmatprep.subr.bf16.mxu0 0
  %157 = vmatpush1.bf16.msra.mxu0 0
  %158 = vmatprep.subr.bf16.mxu0 0
  %159 = vmatpush1.bf16.msra.mxu0 0
  %160 = vmatprep.subr.bf16.mxu0 0
  %161 = vmatpush1.bf16.msra.mxu0 0
  %162 = vmatprep.subr.bf16.mxu0 0
  %163 = vmatpush1.bf16.msra.mxu0 0
  %164 = vmatprep.subr.bf16.mxu0 0
  %165 = vmatpush1.bf16.msra.mxu0 0
  %166 = vmatprep.subr.bf16.mxu0 0
  %167 = vmatpush1.bf16.msra.mxu0 0
  %168 = vmatprep.subr.bf16.mxu0 0
  %169 = vmatpush1.bf16.msra.mxu0 0
  %170 = vmatprep.subr.bf16.mxu0 0
  %171 = vmatpush1.bf16.msra.mxu0 0
  %172 = vmatprep.subr.bf16.mxu0 0
  %173 = vmatpush1.bf16.msra.mxu0 0
  %174 = vmatprep.subr.bf16.mxu0 0
  %175 = vmatpush1.bf16.msra.mxu0 0
  %176 = vmatprep.subr.bf16.mxu0 0
  %177 = vmatpush1.bf16.msra.mxu0 0
  %178 = vmatprep.mubr.bf16.mxu0 0
  %179 = vmatmul.mubr.bf16.gmra.mrb[0].mxu0 %v144
  %v180 = vpop.f32.mrb[0].mxu0
  %v181 = vadd.f32 %v123, %v180
  %v182 = vpop.f32.mrb[0].mxu0
  %v183 = vpop.f32.mrb[0].mxu0
  %v184 = vpop.f32.mrb[0].mxu0
  %185 = vdwg.mxu0
  %v186 = vmax.f32 %v181, 0.0
  %v187 = vpack.c.bf16 %v186, %v186
  %v188 = vlaneseq
  %v189 = vshrl.u32 %v188, 7
  %v190 = vsub.s32 0, %v189
  %v191 = vrot.slane %v38, %v190
  %v198 = vunpack.c.l.b16 %v30
  %v199 = vunpack.c.l.b16 %v31
  %v200 = vunpack.c.l.b16 %v32
  %v201 = vunpack.c.l.b16 %v33
  %v202 = vunpack.c.l.b16 %v34
  %v203 = vunpack.c.l.b16 %v35
  %v204 = vpack.c.b16 %v199, %v198
  %v205 = vpack.c.b16 %v201, %v200
  %v206 = vpack.c.b16 %v203, %v202
  %v211 = vsel %vm142, %v187, 0
  %213 = vmatprep.subr.bf16.mxu0 0
  %214 = vmatpush1.bf16.msra.mxu0 %v204
  %215 = vmatprep.subr.bf16.mxu0 0
  %216 = vmatpush1.bf16.msra.mxu0 %v205
  %217 = vmatprep.subr.bf16.mxu0 0
  %218 = vmatpush1.bf16.msra.mxu0 %v206
  %219 = vmatprep.subr.bf16.mxu0 0
  %220 = vmatpush1.bf16.msra.mxu0 0
  %221 = vmatprep.subr.bf16.mxu0 0
  %222 = vmatpush1.bf16.msra.mxu0 0
  %223 = vmatprep.subr.bf16.mxu0 0
  %224 = vmatpush1.bf16.msra.mxu0 0
  %225 = vmatprep.subr.bf16.mxu0 0
  %226 = vmatpush1.bf16.msra.mxu0 0
  %227 = vmatprep.subr.bf16.mxu0 0
  %228 = vmatpush1.bf16.msra.mxu0 0
  %229 = vmatprep.subr.bf16.mxu0 0
  %230 = vmatpush1.bf16.msra.mxu0 0
  %231 = vmatprep.subr.bf16.mxu0 0
  %232 = vmatpush1.bf16.msra.mxu0 0
  %233 = vmatprep.subr.bf16.mxu0 0
  %234 = vmatpush1.bf16.msra.mxu0 0
  %235 = vmatprep.subr.bf16.mxu0 0
  %236 = vmatpush1.bf16.msra.mxu0 0
  %237 = vmatprep.subr.bf16.mxu0 0
  %238 = vmatpush1.bf16.msra.mxu0 0
  %239 = vmatprep.subr.bf16.mxu0 0
  %240 = vmatpush1.bf16.msra.mxu0 0
  %241 = vmatprep.subr.bf16.mxu0 0
  %242 = vmatpush1.bf16.msra.mxu0 0
  %243 = vmatprep.subr.bf16.mxu0 0
  %244 = vmatpush1.bf16.msra.mxu0 0
  %245 = vmatprep.mubr.bf16.mxu0 0
  %246 = vmatmul.mubr.bf16.gmra.mrb[0].mxu0 %v211
  %v247 = vpop.f32.mrb[0].mxu0
  %v248 = vadd.f32 %v191, %v247
  %v249 = vpop.f32.mrb[0].mxu0
  %v250 = vpop.f32.mrb[0].mxu0
  %v251 = vpop.f32.mrb[0].mxu0
  %252 = vdwg.mxu0
  %v253 = vmul.f32 %v248, 0.5
  %v254 = vmul.f32 %v253, 1.442695
  %v255 = vpow.pop %v254
  %v256 = vunpack.c.l.bf16 %v15
  %258 = vrot.lane.b32.xlu0 %v255, 47
  %v259 = vpop.permute.xlu0 %258
  %v261 = vmul.f32 %v256, %v259
  %263 = vrot.lane.b32.xlu0 %v248, 48
  %v264 = vpop.permute.xlu0 %263
  %v266 = vadd.f32 %v261, %v264
  %268 = vrot.lane.b32.xlu0 %v266, 82
  %v269 = vpop.permute.xlu0 %268
  %271 = vrot.lane.b32.xlu0 %v255, 2
  %v272 = vpop.permute.xlu0 %271
  %vm274 = vcmask 15360
  %v275 = vsel %vm274, %v248, %v269
  %vm276 = vcmask 23552
  %v277 = vsel %vm276, %v275, %v272
  %vm278 = vcmask 31744
  %279 = vst.msk [vmem:[%s3] sm:$0xff] %vm278, %v277
  // Predicated region
  $region14: #{reward_network_forward.1} parent=0 // pred_check
    _
  $region15: #{reward_network_forward.1} parent=0 // pred_check_branch
    %281 = sbr.rel (0) target = $region17
  $region16: #{reward_network_forward.1} parent=0 // pred_region
    _
  $region17: #{reward_network_forward.1} parent=0 // pred_fallthru
    _
  // Predicated region
  $region18: #{reward_network_forward.1} parent=0 // pred_check
    _
  $region19: #{reward_network_forward.1} parent=0 // pred_check_branch
    %283 = sbr.rel (0) target = $region21
  $region20: #{reward_network_forward.1} parent=0 // pred_region
    _
  $region21: #{reward_network_forward.1} parent=0 // pred_fallthru
    _

</llo_original>
